<compile_context>
chip_gen: v7x
topology: tpu7x:2x2x1
jax: 0.10.0
libtpu: 0.0.40
codegen_flags: <defaults>
</compile_context>

<pallas_src>
import jax
import jax.numpy as jnp
from jax.experimental import pallas as pl
from jax.experimental.pallas import tpu as pltpu


_VMEM_TILE_BUDGET = 24 * 1024 * 1024   # double-buffered tile bytes (fits every chip)
_VMEM_LIMIT_BYTES = 40 * 1024 * 1024   # scoped VMEM limit: under v7x's 64 MiB physical


def _round_up(x, m):
    return ((x + m - 1) // m) * m


def _divisor_tiles(total, unit):
    """Multiples of `unit` that evenly divide `total`, largest first."""
    n = total // unit
    return [k * unit for k in range(n, 0, -1) if n % k == 0]


def _pick_tiles(B_pad, N_pad, H, z_bytes, w_bytes, out_bytes, sublane):
    """Largest (TB, TN) divisor tiles whose double-buffered VMEM use fits budget."""

    def usage(tb, tn):
        # Pallas double-buffers every input/output block.
        return 2 * (tb * H * z_bytes + H * tn * w_bytes + tn * 4 + tb * tn * out_bytes)

    tn_candidates = [t for t in _divisor_tiles(N_pad, 128) if t <= 8192] or [128]
    tb_candidates = [t for t in _divisor_tiles(B_pad, sublane) if t <= 512] or [sublane]
    for tn in tn_candidates:                 # prefer lane-widest output tiles
        for tb in tb_candidates:             # then the tallest batch tile that fits
            if usage(tb, tn) <= _VMEM_TILE_BUDGET:
                return tb, tn
    return tb_candidates[-1], tn_candidates[-1]


def _split_for_two_cores(TB, TN, B_pad, N_pad, sublane):
    """If the grid is a single program, split a parallel axis so both v7x
    TensorCores get work. No-op when the problem is too small to split."""
    if (N_pad // TN) * (B_pad // TB) > 1:
        return TB, TN
    smaller_tb = [t for t in _divisor_tiles(B_pad, sublane) if t < TB]
    if smaller_tb:
        return smaller_tb[0], TN
    smaller_tn = [t for t in _divisor_tiles(N_pad, 128) if t < TN]
    if smaller_tn:
        return TB, smaller_tn[0]
    return TB, TN


def _cdefunc_kernel(z_ref, w_ref, b_ref, o_ref):
    # z_ref: (TB, H)   w_ref: (H, TN)   b_ref: (1, TN) f32   o_ref: (TB, TN)
    z = z_ref[...]
    w = w_ref[...]
    if z.dtype != w.dtype:
        z = z.astype(w.dtype)   # bf16 weights -> native bf16 MXU path (f32 accumulate)
    acc = jnp.dot(z, w, preferred_element_type=jnp.float32)
    o_ref[...] = (acc + b_ref[...]).astype(o_ref.dtype)


def prepare_cdefunc_params(weight, bias, param_dtype=jnp.float32):
    """One-time parameter prep (do this at init, NOT per solver step).

    weight: (H*I, H)  -- PyTorch nn.Linear layout (out_features, in_features)
    bias:   (H*I,)
    Returns:
      w_t (H, N_pad): transposed (lane-dense output), lane-padded to 128 lanes,
                      stored in param_dtype (jnp.bfloat16 halves weight HBM traffic).
      b2d (1, N_pad): float32 bias row, lane-padded to 128 lanes.
    """
    out_dim, hidden = weight.shape
    n_pad = _round_up(out_dim, 128)
    w_t = jnp.asarray(weight, dtype=jnp.float32).T.astype(param_dtype)   # (H, H*I)
    b2d = jnp.asarray(bias, dtype=jnp.float32).reshape(1, out_dim)
    if n_pad != out_dim:
        w_t = jnp.pad(w_t, ((0, 0), (0, n_pad - out_dim)))
        b2d = jnp.pad(b2d, ((0, 0), (0, n_pad - out_dim)))
    del hidden
    return w_t, b2d


def cdefunc_forward(t, z, w_t, b2d, hidden_channels, input_channels):
    """Pallas implementation of CDEFunc.forward.

    t:    unused (kept for API parity with the PyTorch module)
    z:    (B, hidden_channels)
    w_t:  (hidden_channels, N_pad)  from prepare_cdefunc_params
    b2d:  (1, N_pad)                from prepare_cdefunc_params
    Returns: (B, hidden_channels, input_channels)
    """
    del t
    B, H = z.shape
    out_dim = hidden_channels * input_channels
    N_pad = w_t.shape[1]
    assert H == hidden_channels
    assert w_t.shape == (H, N_pad) and N_pad == _round_up(out_dim, 128)
    assert b2d.shape == (1, N_pad) and b2d.dtype == jnp.float32

    z_bytes = z.dtype.itemsize
    w_bytes = w_t.dtype.itemsize
    out_dtype = z.dtype
    out_bytes = out_dtype.itemsize
    sublane = 8 if z_bytes == 4 else 16          # bf16 z needs 16-row sublane tiles

    B_pad = _round_up(B, sublane)
    TB, TN = _pick_tiles(B_pad, N_pad, H, z_bytes, w_bytes, out_bytes, sublane)
    TB, TN = _split_for_two_cores(TB, TN, B_pad, N_pad, sublane)

    z_p = z if B_pad == B else jnp.pad(z, ((0, B_pad - B), (0, 0)))

    # Batch axis innermost (fastest): the weight block index only changes on the
    # outer axis, so the whole weight is DMA'd from HBM exactly once per call.
    grid = (N_pad // TN, B_pad // TB)

    cost = pl.CostEstimate(
        flops=2 * B_pad * H * N_pad,
        transcendentals=0,
        bytes_accessed=(B_pad * H * z_bytes + H * N_pad * w_bytes
                        + N_pad * 4 + B_pad * N_pad * out_bytes),
    )

    fz = pl.pallas_call(
        _cdefunc_kernel,
        out_shape=jax.ShapeDtypeStruct((B_pad, N_pad), out_dtype),
        grid_spec=pltpu.PrefetchScalarGridSpec(
            num_scalar_prefetch=0,
            grid=grid,
            in_specs=[
                # z tile: depends only on the (inner) batch axis.
                pl.BlockSpec((TB, H), lambda j, i: (i, 0)),
                # weight tile: depends only on the (outer) N axis -> streamed once,
                # resident in VMEM across all inner batch steps.
                pl.BlockSpec((H, TN), lambda j, i: (0, j)),
                # bias tile: own BlockSpec, also independent of the batch axis.
                pl.BlockSpec((1, TN), lambda j, i: (0, j)),
            ],
            out_specs=pl.BlockSpec((TB, TN), lambda j, i: (i, j)),
        ),
        compiler_params=pltpu.CompilerParams(
            dimension_semantics=("parallel", "parallel"),
            vmem_limit_bytes=_VMEM_LIMIT_BYTES,
        ),
        cost_estimate=cost,
    )(z_p, w_t, b2d)

    # Strip padding only when it was actually applied (usually a no-op).
    if N_pad != out_dim:
        fz = fz[:, :out_dim]
    if B_pad != B:
        fz = fz[:B]
    # PyTorch: fz.view(batch_size, -1, input_channels)
    return fz.reshape(B, hidden_channels, input_channels)


if __name__ == "__main__":
    # Small shapes consistent with the module.
    batch = 8
    hidden_channels = 32
    input_channels = 4
    out_dim = hidden_channels * input_channels

    key = jax.random.PRNGKey(0)
    kz, kw, kb = jax.random.split(key, 3)

    z = jax.random.normal(kz, (batch, hidden_channels), dtype=jnp.float32)
    # Deterministic synthetic parameters (PyTorch Linear layout: (out, in)).
    weight = (jax.random.normal(kw, (out_dim, hidden_channels), dtype=jnp.float32)
              / jnp.sqrt(jnp.float32(hidden_channels)))
    bias = jax.random.normal(kb, (out_dim,), dtype=jnp.float32) * 0.01

    t = jnp.float32(0.0)  # unused, matches the PyTorch signature

    # Full-precision path: matches the PyTorch module semantics.
    w_t, b2d = prepare_cdefunc_params(weight, bias)
    out = cdefunc_forward(t, z, w_t, b2d, hidden_channels, input_channels)
    out = jax.block_until_ready(out)

    ref = (z @ weight.T + bias).reshape(batch, hidden_channels, input_channels)
    assert out.shape == (batch, hidden_channels, input_channels)
    assert jnp.allclose(out, ref, atol=1e-5, rtol=1e-5)

    # Reduced-bandwidth path: bf16 weights / bf16 MXU, f32 accumulation.
    w_t16, b2d16 = prepare_cdefunc_params(weight, bias, param_dtype=jnp.bfloat16)
    out16 = cdefunc_forward(t, z, w_t16, b2d16, hidden_channels, input_channels)
    out16 = jax.block_until_ready(out16)
    assert jnp.allclose(out16, ref, atol=5e-2, rtol=5e-2)

    print("KERNEL_OK")
</pallas_src>

<mosaic_0001>
module attributes {stable_mosaic.version = 11 : i64} {
  func.func @_cdefunc_kernel(%arg0: i32, %arg1: i32, %arg2: memref<8x32xf32, #tpu.memory_space<vmem>>, %arg3: memref<32x128xf32, #tpu.memory_space<vmem>>, %arg4: memref<1x128xf32, #tpu.memory_space<vmem>>, %arg5: memref<8x128xf32, #tpu.memory_space<vmem>>) attributes {dimension_semantics = [#tpu.dimension_semantics<parallel>, #tpu.dimension_semantics<parallel>], iteration_bounds = array<i64: 1, 1>, scalar_prefetch = 0 : i64, scratch_operands = 0 : i64, tpu.core_type = #tpu.core_type<tc>, window_params = [{transform_indices = @transform_0, window_bounds = array<i64: 8, 32>}, {transform_indices = @transform_1, window_bounds = array<i64: 32, 128>}, {transform_indices = @transform_2, window_bounds = array<i64: 1, 128>}, {transform_indices = @transform_3, window_bounds = array<i64: 8, 128>}]} {
    %c0 = arith.constant 0 : index
    %c0_0 = arith.constant 0 : index
    %0 = vector.load %arg2[%c0, %c0_0] : memref<8x32xf32, #tpu.memory_space<vmem>>, vector<8x32xf32>
    %c0_1 = arith.constant 0 : index
    %c0_2 = arith.constant 0 : index
    %1 = vector.load %arg3[%c0_1, %c0_2] : memref<32x128xf32, #tpu.memory_space<vmem>>, vector<32x128xf32>
    %cst = arith.constant dense<0.000000e+00> : vector<8x128xf32>
    %2 = tpu.matmul %0, %1, %cst {dimension_numbers = #tpu.dot_dimension_numbers<[1], [0], [0], [1], [0, 0, 1, 1], [], []>} : vector<8x32xf32>, vector<32x128xf32>, vector<8x128xf32> -> vector<8x128xf32>
    %c0_3 = arith.constant 0 : index
    %c0_4 = arith.constant 0 : index
    %3 = vector.load %arg4[%c0_3, %c0_4] : memref<1x128xf32, #tpu.memory_space<vmem>>, vector<1x128xf32>
    %4 = vector.broadcast %3 : vector<1x128xf32> to vector<8x128xf32>
    %5 = arith.addf %2, %4 : vector<8x128xf32>
    %c0_5 = arith.constant 0 : index
    %c0_6 = arith.constant 0 : index
    %6 = vector.load %arg5[%c0_5, %c0_6] : memref<8x128xf32, #tpu.memory_space<vmem>>, vector<8x128xf32>
    tpu.vector_store %arg5[%c0_5, %c0_6], %5 {strides = array<i32>} : memref<8x128xf32, #tpu.memory_space<vmem>>, vector<8x128xf32>,
    return
  }
  func.func @transform_0(%arg0: i32, %arg1: i32) -> (i32, i32) {
    %c0_i32 = arith.constant 0 : i32
    %c0_i32_0 = arith.constant 0 : i32
    return %arg1, %c0_i32 : i32, i32
  }
  func.func @transform_1(%arg0: i32, %arg1: i32) -> (i32, i32) {
    %c0_i32 = arith.constant 0 : i32
    %c0_i32_0 = arith.constant 0 : i32
    return %c0_i32, %arg0 : i32, i32
  }
  func.func @transform_2(%arg0: i32, %arg1: i32) -> (i32, i32) {
    %c0_i32 = arith.constant 0 : i32
    %c0_i32_0 = arith.constant 0 : i32
    return %c0_i32, %arg0 : i32, i32
  }
  func.func @transform_3(%arg0: i32, %arg1: i32) -> (i32, i32) {
    %c0_i32 = arith.constant 0 : i32
    return %arg1, %arg0 : i32, i32
  }
}

</mosaic_0001>

<llo_original>
// kernel: tpu_custom_call.1
$region0: #{tpu_custom_call.1}
  #allocation0 [shape = 'u32[]', space=smem, size = 0x4, offset = 0x4, fixed_abs, tag = 'smem constant byte address 0x4 - core index']
  #allocation1 [shape = 'u32[144,128]{1,0:T(1,128)}', space=vmem, size = 0x12000, scoped, tag = 'internal scratch']
  %s0 = inlined_call_operand.hbm [shape: f32[8,32], index: 0, kind: input, shape index: {}]
  %s1 = inlined_call_operand.hbm [shape: f32[32,128], index: 1, kind: input, shape index: {}]
  %s2 = inlined_call_operand.vmem [shape: f32[1,128], index: 2, kind: input, shape index: {}]
  %s3 = inlined_call_operand.hbm [shape: f32[8,128], index: 3, kind: output, shape index: {}]
  %s4 = sld [smem:[#allocation0]]
  $region30: #{tpu_custom_call.1} parent=0
    _
  %s6 = ssub.s32 1, %s4
  %s7 = scalar_select 0, %s6, %s4
  $region1: #{tpu_custom_call.1} parent=0
    #allocation2 [shape = 'u8[4096]{0}', space=vmem, size = 0x1000, scoped, tag = 'input window, operand 0, single buffered']
    #allocation3 [shape = 's32[1]{0}', space=sflag, size = 0x4, scoped, tag = 'scoped memory for tpu_custom_call.1']
    #allocation4 [shape = 's32[1]{0}', space=sflag, size = 0x4, scoped, tag = 'scoped memory for tpu_custom_call.1']
    #allocation5 [shape = 'u8[16384]{0}', space=vmem, size = 0x4000, scoped, tag = 'input window, operand 1, single buffered']
    #allocation6 [shape = 's32[1]{0}', space=sflag, size = 0x4, scoped, tag = 'scoped memory for tpu_custom_call.1']
    #allocation7 [shape = 'u8[4096]{0}', space=vmem, size = 0x1000, scoped, tag = 'output window, operand 0, single buffered']
    %8 = vsyncpa [#allocation3], 0
    %9 = vsyncpa [#allocation6], 0
    %10 = vsyncpa [#allocation4], 0
    // Predicated region
    $region2: #{tpu_custom_call.1} parent=1 // pred_check
      _
    $region3: #{tpu_custom_call.1} parent=1 // pred_check_branch
      %12 = sbr.rel (0) target = $region5
    $region4: #{tpu_custom_call.1} parent=1 // pred_region
      %s14 = ssub.s32 128, 128
      %15 = vsyncadd [#allocation3], %s14
      %s17 = sshll.u32 [#allocation2], 4
      %s18 = int_to_ptr.vmem [resolvable:$true] %s17
      %20 = dma.hbm_to_vmem [thread:$0]  %s0, 128, %s18, [#allocation3]
    $region5: #{tpu_custom_call.1} parent=1 // pred_fallthru
      _
    // Predicated region
    $region6: #{tpu_custom_call.1} parent=1 // pred_check
      _
    $region7: #{tpu_custom_call.1} parent=1 // pred_check_branch
      %22 = sbr.rel (0) target = $region9
    $region8: #{tpu_custom_call.1} parent=1 // pred_region
      %s24 = ssub.s32 512, 512
      %25 = vsyncadd [#allocation6], %s24
      %s26 = sshll.u32 [#allocation5], 4
      %s27 = int_to_ptr.vmem [resolvable:$true] %s26
      %32 = dma.hbm_to_vmem [thread:$0]  %s1, 512, %s27, [#allocation6], 128, 128, 8
    $region9: #{tpu_custom_call.1} parent=1 // pred_fallthru
      _
    // Predicated region
    $region10: #{tpu_custom_call.1} parent=1 // pred_check
      _
    $region11: #{tpu_custom_call.1} parent=1 // pred_check_branch
      %34 = sbr.rel (0) target = $region13
    $region12: #{tpu_custom_call.1} parent=1 // pred_region
      _
    $region13: #{tpu_custom_call.1} parent=1 // pred_fallthru
      _
    // Predicated region
    $region14: #{tpu_custom_call.1} parent=1 // pred_check
      _
    $region15: #{tpu_custom_call.1} parent=1 // pred_check_branch
      %36 = sbr.rel (0) target = $region17
    $region16: #{tpu_custom_call.1} parent=1 // pred_region
      %37 = dma.done [#allocation3], 128
    $region17: #{tpu_custom_call.1} parent=1 // pred_fallthru
      _
    // Predicated region
    $region18: #{tpu_custom_call.1} parent=1 // pred_check
      _
    $region19: #{tpu_custom_call.1} parent=1 // pred_check_branch
      %39 = sbr.rel (0) target = $region21
    $region20: #{tpu_custom_call.1} parent=1 // pred_region
      %40 = dma.done [#allocation6], 512
    $region21: #{tpu_custom_call.1} parent=1 // pred_fallthru
      _
    %v41 = vld [vmem:[#allocation2] sm:$0xff]
    %v42 = vld [vmem:[#allocation5] sm:$0xff]
    %v43 = vld [vmem:[#allocation5 + $0x8] sm:$0xff]
    %v44 = vld [vmem:[#allocation5 + $0x10] sm:$0xff]
    %v45 = vld [vmem:[#allocation5 + $0x18] sm:$0xff]
    %v46 = vld [vmem:[%s2] sm:$0x1]
    %v48 = vlaneseq
    %v49 = vshrl.u32 %v48, 7
    %v50 = vsub.s32 0, %v49
    %v51 = vrot.slane %v46, %v50
    %vm53 = vcmask 261120
    %v55 = vsel %vm53, %v41, 0
    %57 = vmatprep.subr.mxu0 0.0
    %58 = vmatpush1.msra.mxu0 %v42
    %59 = vmatprep.subr.mxu0 0.0
    %60 = vmatpush1.msra.mxu0 %v43
    %61 = vmatprep.subr.mxu0 0.0
    %62 = vmatpush1.msra.mxu0 %v44
    %63 = vmatprep.subr.mxu0 0.0
    %64 = vmatpush1.msra.mxu0 %v45
    %65 = vmatprep.subr.mxu0 0.0
    %66 = vmatpush1.msra.mxu0 0.0
    %67 = vmatprep.subr.mxu0 0.0
    %68 = vmatpush1.msra.mxu0 0.0
    %69 = vmatprep.subr.mxu0 0.0
    %70 = vmatpush1.msra.mxu0 0.0
    %71 = vmatprep.subr.mxu0 0.0
    %72 = vmatpush1.msra.mxu0 0.0
    %73 = vmatprep.subr.mxu0 0.0
    %74 = vmatpush1.msra.mxu0 0.0
    %75 = vmatprep.subr.mxu0 0.0
    %76 = vmatpush1.msra.mxu0 0.0
    %77 = vmatprep.subr.mxu0 0.0
    %78 = vmatpush1.msra.mxu0 0.0
    %79 = vmatprep.subr.mxu0 0.0
    %80 = vmatpush1.msra.mxu0 0.0
    %81 = vmatprep.subr.mxu0 0.0
    %82 = vmatpush1.msra.mxu0 0.0
    %83 = vmatprep.subr.mxu0 0.0
    %84 = vmatpush1.msra.mxu0 0.0
    %85 = vmatprep.subr.mxu0 0.0
    %86 = vmatpush1.msra.mxu0 0.0
    %87 = vmatprep.subr.mxu0 0.0
    %88 = vmatpush1.msra.mxu0 0.0
    %89 = vmatprep.subr.mxu0 0.0
    %90 = vmatpush1.msra.mxu0 0.0
    %91 = vmatprep.subr.mxu0 0.0
    %92 = vmatpush1.msra.mxu0 0.0
    %93 = vmatprep.subr.mxu0 0.0
    %94 = vmatpush1.msra.mxu0 0.0
    %95 = vmatprep.subr.mxu0 0.0
    %96 = vmatpush1.msra.mxu0 0.0
    %97 = vmatprep.subr.mxu0 0.0
    %98 = vmatpush1.msra.mxu0 0.0
    %99 = vmatprep.subr.mxu0 0.0
    %100 = vmatpush1.msra.mxu0 0.0
    %101 = vmatprep.subr.mxu0 0.0
    %102 = vmatpush1.msra.mxu0 0.0
    %103 = vmatprep.subr.mxu0 0.0
    %104 = vmatpush1.msra.mxu0 0.0
    %105 = vmatprep.subr.mxu0 0.0
    %106 = vmatpush1.msra.mxu0 0.0
    %107 = vmatprep.subr.mxu0 0.0
    %108 = vmatpush1.msra.mxu0 0.0
    %109 = vmatprep.subr.mxu0 0.0
    %110 = vmatpush1.msra.mxu0 0.0
    %111 = vmatprep.subr.mxu0 0.0
    %112 = vmatpush1.msra.mxu0 0.0
    %113 = vmatprep.subr.mxu0 0.0
    %114 = vmatpush1.msra.mxu0 0.0
    %115 = vmatprep.subr.mxu0 0.0
    %116 = vmatpush1.msra.mxu0 0.0
    %117 = vmatprep.subr.mxu0 0.0
    %118 = vmatpush1.msra.mxu0 0.0
    %119 = vmatprep.subr.mxu0 0.0
    %120 = vmatpush1.msra.mxu0 0.0
    %121 = vmatprep.mubr.f32.mxu0 0.0
    %122 = vmatmul.mubr.f32.gmra.mrb[0].mxu0 %v55
    %v123 = vpop.f32.mrb[0].mxu0
    %v124 = vadd.f32 %v51, %v123
    %v125 = vpop.f32.mrb[0].mxu0
    %126 = vdwg.mxu0
    %127 = vst [vmem:[#allocation7] sm:$0xff] %v124
    // Predicated region
    $region22: #{tpu_custom_call.1} parent=1 // pred_check
      _
    $region23: #{tpu_custom_call.1} parent=1 // pred_check_branch
      %129 = sbr.rel (0) target = $region25
    $region24: #{tpu_custom_call.1} parent=1 // pred_region
      %s131 = ssub.s32 128, 128
      %132 = vsyncadd [#allocation4], %s131
      %s134 = sshll.u32 [#allocation7], 4
      %s135 = int_to_ptr.vmem [resolvable:$true] %s134
      %137 = dma.vmem_to_hbm [thread:$0]  %s135, 128, %s3, [#allocation4]
    $region25: #{tpu_custom_call.1} parent=1 // pred_fallthru
      _
    // Predicated region
    $region26: #{tpu_custom_call.1} parent=1 // pred_check
      _
    $region27: #{tpu_custom_call.1} parent=1 // pred_check_branch
      %139 = sbr.rel (0) target = $region29
    $region28: #{tpu_custom_call.1} parent=1 // pred_region
      %140 = dma.done [#allocation4], 128
    $region29: #{tpu_custom_call.1} parent=1 // pred_fallthru
      _
    %141 = vsyncpa [#allocation3], 1
    %142 = vsyncpa [#allocation6], 1
    %143 = vsyncpa [#allocation4], 1

</llo_original>
